<compile_context>
chip_gen: v7x
topology: tpu7x:2x2x1
jax: 0.10.0
libtpu: 0.0.40
codegen_flags: <defaults>
</compile_context>

<pallas_src>
import functools

import jax
import jax.numpy as jnp
from jax.experimental import pallas as pl
from jax.experimental.pallas import tpu as pltpu


def _round_up(x, m):
    return -(-x // m) * m


def expand_path_kernel(xw_ref, w1_ref, w2_ref, b2_ref, ye_ref, yo_ref, *,
                       tl, cop, seq_len):
    """One length-tile of the fused ExpandPath forward (polyphase form).

    xw_ref : (1, Cin_p, tl+4) stacked input window [x1 | x2_even | x2_odd | 1 | pad]
             with 2 halo columns on each side (zeros at the global edges).
    w1_ref : (4*cop, Cin_p) fused conv1 (+ folded ConvTranspose1d & biases) weights,
             row blocks = [even_prev; even_curr; odd_curr; odd_next].
    w2_ref : (4*cop, 2*cop) fused conv2 weights acting on hstack = [h_even; h_odd].
    b2_ref : (2*cop, 1) f32 conv2 bias for the stacked [y_even; y_odd] rows.
    ye_ref / yo_ref : (cop, tl) even / odd output columns of this tile.
    """
    f32 = jnp.float32
    xw = xw_ref[0]                                               # (Cin_p, tl+4)

    # ---- conv1 (+ ConvTranspose1d fold): ONE fat MXU matmul, then shifted adds ----
    p = jnp.dot(w1_ref[...], xw, preferred_element_type=f32)     # (4cop, tl+4)
    h_e = jnp.maximum(p[0 * cop:1 * cop, 0:tl + 2]
                      + p[1 * cop:2 * cop, 1:tl + 3], 0.0)       # h[2t]
    h_o = jnp.maximum(p[2 * cop:3 * cop, 1:tl + 3]
                      + p[3 * cop:4 * cop, 2:tl + 4], 0.0)       # h[2t+1]

    # 'same' zero padding of h outside [0, L): single-row mask, two selects.
    col = (pl.program_id(0) * tl - 1
           + jax.lax.broadcasted_iota(jnp.int32, (1, tl + 2), 1))
    valid = jnp.logical_and(col >= 0, col < seq_len)
    h_e = jnp.where(valid, h_e, 0.0)
    h_o = jnp.where(valid, h_o, 0.0)

    # ---- conv2: ONE fat MXU matmul on stacked activations, then shifted adds ----
    hs = jnp.concatenate([h_e, h_o], axis=0).astype(w2_ref.dtype)  # (2cop, tl+2)
    pq = jnp.dot(w2_ref[...], hs, preferred_element_type=f32)      # (4cop, tl+2)
    b2 = b2_ref[...]
    y_e = (pq[0 * cop:1 * cop, 1:tl + 1]          # w21@h_e[t]   + w22@h_o[t]
           + pq[2 * cop:3 * cop, 0:tl]            # w20@h_o[t-1]
           + b2[0:cop])
    y_o = (pq[1 * cop:2 * cop, 1:tl + 1]          # w20@h_e[t]   + w21@h_o[t]
           + pq[3 * cop:4 * cop, 2:tl + 2]        # w22@h_e[t+1]
           + b2[cop:2 * cop])
    ye_ref[...] = jnp.maximum(y_e, 0.0).astype(ye_ref.dtype)
    yo_ref[...] = jnp.maximum(y_o, 0.0).astype(yo_ref.dtype)


def init_params(key, in_channels, out_channels):
    C, C2, Co = in_channels, in_channels // 2, out_channels
    ks = jax.random.split(key, 6)
    s = 0.1
    return dict(
        wt=jax.random.normal(ks[0], (C, C2, 2), jnp.float32) * s,   # ConvTranspose1d weight
        bt=jax.random.normal(ks[1], (C2,), jnp.float32) * s,        # ConvTranspose1d bias
        w1=jax.random.normal(ks[2], (Co, C, 3), jnp.float32) * s,   # DoubleConv conv1
        b1=jax.random.normal(ks[3], (Co,), jnp.float32) * s,
        w2=jax.random.normal(ks[4], (Co, Co, 3), jnp.float32) * s,  # DoubleConv conv2
        b2=jax.random.normal(ks[5], (Co,), jnp.float32) * s,
    )


def expand_path_pallas(x1, x2, params, *, tile_l=1024, compute_dtype=jnp.bfloat16):
    """x1: (C, L), x2: (C//2, 2L) -> (Co, 2L)."""
    f32 = jnp.float32
    C, L = x1.shape
    C2 = C // 2
    assert x2.shape == (C2, 2 * L)
    Co = params["w1"].shape[0]
    assert tile_l % 128 == 0, "tile_l must be a multiple of 128 (lane width)"

    # ---- length tiling over the polyphase (length-L) domain ----
    TLf = _round_up(L, 128)
    if TLf <= tile_l:
        # Prefer >= 2 tiles so a dual-TensorCore chip (v7x) gets both cores busy.
        TL = _round_up(TLf // 2, 128) if TLf >= 256 else TLf
    else:
        TL = tile_l
    nt = -(-L // TL)
    Lp = nt * TL

    Co_p = _round_up(Co, 8)
    Cin = 2 * C + 1                        # [x1 (C) | x2_even (C2) | x2_odd (C2) | ones]
    Cin_p = _round_up(Cin, 8)

    # ---- fold ConvTranspose1d + channel-concat + conv1 taps into combined weights ----
    wt = params["wt"].astype(f32)          # (C, C2, 2)
    Wt0 = wt[:, :, 0].T                    # up[:, 2t]   = Wt0 @ x1[:, t] + bt
    Wt1 = wt[:, :, 1].T                    # up[:, 2t+1] = Wt1 @ x1[:, t] + bt
    bt = params["bt"].astype(f32)
    w1 = params["w1"].astype(f32)          # (Co, C, 3)
    w1a = w1[:, :C2, :]                    # acts on the skip (x2) channels
    w1b = w1[:, C2:, :]                    # acts on the upsampled channels
    b1 = params["b1"].astype(f32)
    w2 = params["w2"].astype(f32)          # (Co, Co, 3)
    b2 = params["b2"].astype(f32)

    def mk(x1_blk, x2e_blk, x2o_blk, ones_blk):
        m = jnp.concatenate([x1_blk, x2e_blk, x2o_blk, ones_blk[:, None]], axis=1)
        return jnp.pad(m, ((0, Co_p - Co), (0, Cin_p - Cin)))

    z = jnp.zeros((Co, C2), f32)
    # even output column 2t:  prev = col 2t-1 (odd),  curr = cols 2t (even) & 2t+1 (odd)
    m_e_prev = mk(w1b[:, :, 0] @ Wt1, z, w1a[:, :, 0], w1b[:, :, 0] @ bt)
    m_e_curr = mk(w1b[:, :, 1] @ Wt0 + w1b[:, :, 2] @ Wt1, w1a[:, :, 1], w1a[:, :, 2],
                  (w1b[:, :, 1] + w1b[:, :, 2]) @ bt + b1)
    # odd output column 2t+1: curr = cols 2t (even) & 2t+1 (odd),  next = col 2t+2 (even)
    m_o_curr = mk(w1b[:, :, 0] @ Wt0 + w1b[:, :, 1] @ Wt1, w1a[:, :, 0], w1a[:, :, 1],
                  (w1b[:, :, 0] + w1b[:, :, 1]) @ bt + b1)
    m_o_next = mk(w1b[:, :, 2] @ Wt0, w1a[:, :, 2], z, w1b[:, :, 2] @ bt)
    w1_all = jnp.concatenate([m_e_prev, m_e_curr, m_o_curr, m_o_next],
                             axis=0).astype(compute_dtype)          # (4Co_p, Cin_p)

    def pad2(m):
        return jnp.pad(m, ((0, Co_p - Co), (0, Co_p - Co)))

    w20, w21, w22 = pad2(w2[:, :, 0]), pad2(w2[:, :, 1]), pad2(w2[:, :, 2])
    zc = jnp.zeros((Co_p, Co_p), f32)
    w2_all = jnp.concatenate([
        jnp.concatenate([w21, w22], axis=1),   # y_e "curr column" taps
        jnp.concatenate([w20, w21], axis=1),   # y_o "curr column" taps
        jnp.concatenate([zc, w20], axis=1),    # y_e shifted tap  (h_o[t-1])
        jnp.concatenate([w22, zc], axis=1),    # y_o shifted tap  (h_e[t+1])
    ], axis=0).astype(compute_dtype)           # (4Co_p, 2Co_p)
    b2p = jnp.pad(b2, (0, Co_p - Co))
    b2s = jnp.concatenate([b2p, b2p]).reshape(2 * Co_p, 1)          # stays f32

    # ---- stacked polyphase input slab + overlapped (halo=2) per-tile windows ----
    x2e = x2[:, 0::2].astype(f32)          # x2 at even columns
    x2o = x2[:, 1::2].astype(f32)          # x2 at odd columns
    ones = jnp.ones((1, L), f32)           # valid-column indicator (gates b1/bt at edges)
    X = jnp.concatenate([x1.astype(f32), x2e, x2o, ones], axis=0)   # (Cin, L)
    X = jnp.pad(X, ((0, Cin_p - Cin), (0, Lp - L))).astype(compute_dtype)
    Xpad = jnp.pad(X, ((0, 0), (2, 2)))                             # halo (zeros at edges)
    # TODO(synk): replace this host-side overlapping-window gather with an
    # element-indexed BlockSpec / in-kernel make_async_copy halo fetch to drop one
    # input-sized HBM pass.
    cols = jnp.arange(nt)[:, None] * TL + jnp.arange(TL + 4)[None, :]
    xwin = jnp.transpose(Xpad[:, cols], (1, 0, 2))                  # (nt, Cin_p, TL+4)

    # VMEM budget computed from the actual per-tile footprint (v7x has 64 MiB/TC).
    isz = jnp.dtype(compute_dtype).itemsize
    vmem_est = (2 * Cin_p * (TL + 4) * isz                          # dbl-buffered window
                + (4 * Co_p * Cin_p + 8 * Co_p * Co_p) * isz        # resident weights
                + 2 * Co_p * 128 * 4                                # bias (lane-padded)
                + 2 * 2 * Co_p * TL * 4                             # dbl-buffered outputs
                + (4 * Co_p * (TL + 4) + 6 * Co_p * (TL + 2)
                   + 2 * Co_p * TL) * 4)                            # live intermediates
    vmem_limit = int(min(96 * 1024 * 1024, max(32 * 1024 * 1024, 2 * vmem_est)))

    kernel = functools.partial(expand_path_kernel, tl=TL, cop=Co_p, seq_len=L)
    ye, yo = pl.pallas_call(
        kernel,
        out_shape=(jax.ShapeDtypeStruct((Co_p, Lp), f32),
                   jax.ShapeDtypeStruct((Co_p, Lp), f32)),
        grid=(nt,),
        in_specs=[
            pl.BlockSpec((1, Cin_p, TL + 4), lambda i: (i, 0, 0)),  # per-tile window
            pl.BlockSpec((4 * Co_p, Cin_p), lambda i: (0, 0)),      # resident weights
            pl.BlockSpec((4 * Co_p, 2 * Co_p), lambda i: (0, 0)),
            pl.BlockSpec((2 * Co_p, 1), lambda i: (0, 0)),
        ],
        out_specs=(pl.BlockSpec((Co_p, TL), lambda i: (0, i)),
                   pl.BlockSpec((Co_p, TL), lambda i: (0, i))),
        compiler_params=pltpu.CompilerParams(
            dimension_semantics=("parallel",),
            vmem_limit_bytes=vmem_limit),
    )(xwin, w1_all, w2_all, b2s)

    # Interleave even/odd output columns (wrapper-side layout plumbing only).
    # TODO(synk): move the interleave into the kernel (lane-dense (Co_p, 2*TL) block)
    # once the in-kernel stack+reshape is verified to lower to XLU lane shuffles.
    y = jnp.stack([ye[:Co], yo[:Co]], axis=-1).reshape(Co, 2 * Lp)
    return y[:, :2 * L]


def expand_path_ref(x1, x2, params):
    """Pure-JAX reference using lax convolutions (matches PyTorch semantics)."""
    wt = params["wt"]
    # ConvTranspose1d == lhs-dilated correlation with transposed, k-flipped kernel.
    w_conv = jnp.transpose(wt, (1, 0, 2))[:, :, ::-1]          # (C//2, C, 2)
    up = jax.lax.conv_general_dilated(
        x1[None], w_conv, window_strides=(1,), padding=[(1, 1)],
        lhs_dilation=(2,), dimension_numbers=("NCH", "OIH", "NCH"))[0]
    up = up + params["bt"][:, None]
    x = jnp.concatenate([x2, up], axis=0)

    def conv_same(xa, w, b):
        y = jax.lax.conv_general_dilated(
            xa[None], w, window_strides=(1,), padding=[(1, 1)],
            dimension_numbers=("NCH", "OIH", "NCH"))[0]
        return y + b[:, None]

    h = jax.nn.relu(conv_same(x, params["w1"], params["b1"]))
    return jax.nn.relu(conv_same(h, params["w2"], params["b2"]))


if __name__ == "__main__":
    key = jax.random.PRNGKey(0)

    # Test 1: small shapes consistent with the module (single/dual tile).
    k1, k2, kp = jax.random.split(jax.random.fold_in(key, 0), 3)
    C, Co, L = 8, 8, 8
    x1 = jax.random.normal(k1, (C, L), jnp.float32)                  # (C, L)
    x2 = jax.random.normal(k2, (C // 2, 2 * L), jnp.float32)         # (C//2, 2L)
    params = init_params(kp, C, Co)
    ref = expand_path_ref(x1, x2, params)

    out = expand_path_pallas(x1, x2, params, compute_dtype=jnp.float32)
    jax.block_until_ready(out)
    assert out.shape == ref.shape == (Co, 2 * L)
    err = float(jnp.max(jnp.abs(out - ref)))
    assert err < 1e-3, f"test1 (f32) mismatch vs reference: {err}"

    out = expand_path_pallas(x1, x2, params)          # default bf16 inputs, f32 accum
    jax.block_until_ready(out)
    err = float(jnp.max(jnp.abs(out - ref)))
    assert err < 5e-2, f"test1 (bf16) mismatch vs reference: {err}"

    # Test 2: multi-tile grid (exercises halo handling + pipelined length tiling).
    k1, k2, kp = jax.random.split(jax.random.fold_in(key, 1), 3)
    C, Co, L = 16, 8, 256
    x1 = jax.random.normal(k1, (C, L), jnp.float32)
    x2 = jax.random.normal(k2, (C // 2, 2 * L), jnp.float32)
    params = init_params(kp, C, Co)
    ref = expand_path_ref(x1, x2, params)

    out = expand_path_pallas(x1, x2, params, tile_l=128, compute_dtype=jnp.float32)
    jax.block_until_ready(out)
    assert out.shape == ref.shape == (Co, 2 * L)
    err = float(jnp.max(jnp.abs(out - ref)))
    assert err < 1e-3, f"test2 (f32) mismatch vs reference: {err}"

    out = expand_path_pallas(x1, x2, params, tile_l=128)
    jax.block_until_ready(out)
    err = float(jnp.max(jnp.abs(out - ref)))
    assert err < 5e-2, f"test2 (bf16) mismatch vs reference: {err}"

    print("KERNEL_OK")
</pallas_src>

<mosaic_0001>
module attributes {stable_mosaic.version = 11 : i64} {
  func.func @expand_path_kernel(%arg0: i32, %arg1: memref<1x24x132xf32, #tpu.memory_space<vmem>>, %arg2: memref<32x24xf32, #tpu.memory_space<vmem>>, %arg3: memref<32x16xf32, #tpu.memory_space<vmem>>, %arg4: memref<16x1xf32, #tpu.memory_space<vmem>>, %arg5: memref<8x128xf32, #tpu.memory_space<vmem>>, %arg6: memref<8x128xf32, #tpu.memory_space<vmem>>) attributes {dimension_semantics = [#tpu.dimension_semantics<parallel>], iteration_bounds = array<i64: 1>, scalar_prefetch = 0 : i64, scratch_operands = 0 : i64, tpu.core_type = #tpu.core_type<tc>, window_params = [{transform_indices = @transform_0, window_bounds = array<i64: 1, 24, 132>}, {pipeline_mode = #tpu.pipeline_mode<synchronous>, transform_indices = @transform_1, window_bounds = array<i64: 32, 24>}, {pipeline_mode = #tpu.pipeline_mode<synchronous>, transform_indices = @transform_2, window_bounds = array<i64: 32, 16>}, {pipeline_mode = #tpu.pipeline_mode<synchronous>, transform_indices = @transform_3, window_bounds = array<i64: 16, 1>}, {transform_indices = @transform_4, window_bounds = array<i64: 8, 128>}, {transform_indices = @transform_5, window_bounds = array<i64: 8, 128>}]} {
    %c0 = arith.constant 0 : index
    %c0_0 = arith.constant 0 : index
    %c0_1 = arith.constant 0 : index
    %0 = vector.load %arg1[%c0, %c0_0, %c0_1] : memref<1x24x132xf32, #tpu.memory_space<vmem>>, vector<1x24x132xf32>
    %1 = vector.shape_cast %0 : vector<1x24x132xf32> to vector<24x132xf32>
    %c0_2 = arith.constant 0 : index
    %c0_3 = arith.constant 0 : index
    %2 = vector.load %arg2[%c0_2, %c0_3] : memref<32x24xf32, #tpu.memory_space<vmem>>, vector<32x24xf32>
    %cst = arith.constant dense<0.000000e+00> : vector<32x132xf32>
    %3 = tpu.matmul %2, %1, %cst {dimension_numbers = #tpu.dot_dimension_numbers<[1], [0], [0], [1], [0, 0, 1, 1], [], []>} : vector<32x24xf32>, vector<24x132xf32>, vector<32x132xf32> -> vector<32x132xf32>
    %4 = vector.extract_strided_slice %3 {offsets = [0, 0], sizes = [8, 130], strides = [1, 1]} : vector<32x132xf32> to vector<8x130xf32>
    %5 = vector.extract_strided_slice %3 {offsets = [8, 1], sizes = [8, 130], strides = [1, 1]} : vector<32x132xf32> to vector<8x130xf32>
    %6 = arith.addf %4, %5 : vector<8x130xf32>
    %cst_4 = arith.constant 0.000000e+00 : f32
    %7 = vector.broadcast %cst_4 : f32 to vector<8x130xf32>
    %8 = arith.maximumf %6, %7 : vector<8x130xf32>
    %9 = vector.extract_strided_slice %3 {offsets = [16, 1], sizes = [8, 130], strides = [1, 1]} : vector<32x132xf32> to vector<8x130xf32>
    %10 = vector.extract_strided_slice %3 {offsets = [24, 2], sizes = [8, 130], strides = [1, 1]} : vector<32x132xf32> to vector<8x130xf32>
    %11 = arith.addf %9, %10 : vector<8x130xf32>
    %cst_5 = arith.constant 0.000000e+00 : f32
    %12 = vector.broadcast %cst_5 : f32 to vector<8x130xf32>
    %13 = arith.maximumf %11, %12 : vector<8x130xf32>
    %c128_i32 = arith.constant 128 : i32
    %14 = arith.muli %arg0, %c128_i32 : i32
    %c1_i32 = arith.constant 1 : i32
    %15 = arith.subi %14, %c1_i32 : i32
    %16 = tpu.iota {dimensions = array<i32: 1>} : vector<1x130xi32>
    %17 = vector.broadcast %15 : i32 to vector<1x130xi32>
    %18 = arith.addi %17, %16 : vector<1x130xi32>
    %c0_i32 = arith.constant 0 : i32
    %19 = vector.broadcast %c0_i32 : i32 to vector<1x130xi32>
    %20 = arith.cmpi sge, %18, %19 : vector<1x130xi32>
    %c8_i32 = arith.constant 8 : i32
    %21 = vector.broadcast %c8_i32 : i32 to vector<1x130xi32>
    %22 = arith.cmpi slt, %18, %21 : vector<1x130xi32>
    %23 = arith.andi %20, %22 : vector<1x130xi1>
    %cst_6 = arith.constant 0.000000e+00 : f32
    %24 = vector.shape_cast %23 : vector<1x130xi1> to vector<1x130xi1>
    %25 = vector.broadcast %24 : vector<1x130xi1> to vector<8x130xi1>
    %26 = vector.broadcast %cst_6 : f32 to vector<8x130xf32>
    %27 = arith.select %25, %8, %26 : vector<8x130xi1>, vector<8x130xf32>
    %cst_7 = arith.constant 0.000000e+00 : f32
    %28 = vector.shape_cast %23 : vector<1x130xi1> to vector<1x130xi1>
    %29 = vector.broadcast %28 : vector<1x130xi1> to vector<8x130xi1>
    %30 = vector.broadcast %cst_7 : f32 to vector<8x130xf32>
    %31 = arith.select %29, %13, %30 : vector<8x130xi1>, vector<8x130xf32>
    %32 = tpu.concatenate %27, %31 in 0 : vector<8x130xf32>, vector<8x130xf32> -> vector<16x130xf32>
    %c0_8 = arith.constant 0 : index
    %c0_9 = arith.constant 0 : index
    %33 = vector.load %arg3[%c0_8, %c0_9] : memref<32x16xf32, #tpu.memory_space<vmem>>, vector<32x16xf32>
    %cst_10 = arith.constant dense<0.000000e+00> : vector<32x130xf32>
    %34 = tpu.matmul %33, %32, %cst_10 {dimension_numbers = #tpu.dot_dimension_numbers<[1], [0], [0], [1], [0, 0, 1, 1], [], []>} : vector<32x16xf32>, vector<16x130xf32>, vector<32x130xf32> -> vector<32x130xf32>
    %c0_11 = arith.constant 0 : index
    %c0_12 = arith.constant 0 : index
    %35 = vector.load %arg4[%c0_11, %c0_12] : memref<16x1xf32, #tpu.memory_space<vmem>>, vector<16x1xf32>
    %36 = vector.extract_strided_slice %34 {offsets = [0, 1], sizes = [8, 128], strides = [1, 1]} : vector<32x130xf32> to vector<8x128xf32>
    %37 = vector.extract_strided_slice %34 {offsets = [16, 0], sizes = [8, 128], strides = [1, 1]} : vector<32x130xf32> to vector<8x128xf32>
    %38 = arith.addf %36, %37 : vector<8x128xf32>
    %39 = vector.extract_strided_slice %35 {offsets = [0, 0], sizes = [8, 1], strides = [1, 1]} : vector<16x1xf32> to vector<8x1xf32>
    %40 = vector.broadcast %39 : vector<8x1xf32> to vector<8x128xf32>
    %41 = arith.addf %38, %40 : vector<8x128xf32>
    %42 = vector.extract_strided_slice %34 {offsets = [8, 1], sizes = [8, 128], strides = [1, 1]} : vector<32x130xf32> to vector<8x128xf32>
    %43 = vector.extract_strided_slice %34 {offsets = [24, 2], sizes = [8, 128], strides = [1, 1]} : vector<32x130xf32> to vector<8x128xf32>
    %44 = arith.addf %42, %43 : vector<8x128xf32>
    %45 = vector.extract_strided_slice %35 {offsets = [8, 0], sizes = [8, 1], strides = [1, 1]} : vector<16x1xf32> to vector<8x1xf32>
    %46 = vector.broadcast %45 : vector<8x1xf32> to vector<8x128xf32>
    %47 = arith.addf %44, %46 : vector<8x128xf32>
    %cst_13 = arith.constant 0.000000e+00 : f32
    %48 = vector.broadcast %cst_13 : f32 to vector<8x128xf32>
    %49 = arith.maximumf %41, %48 : vector<8x128xf32>
    %c0_14 = arith.constant 0 : index
    %c0_15 = arith.constant 0 : index
    %50 = vector.load %arg5[%c0_14, %c0_15] : memref<8x128xf32, #tpu.memory_space<vmem>>, vector<8x128xf32>
    tpu.vector_store %arg5[%c0_14, %c0_15], %49 {strides = array<i32>} : memref<8x128xf32, #tpu.memory_space<vmem>>, vector<8x128xf32>,
    %cst_16 = arith.constant 0.000000e+00 : f32
    %51 = vector.broadcast %cst_16 : f32 to vector<8x128xf32>
    %52 = arith.maximumf %47, %51 : vector<8x128xf32>
    %c0_17 = arith.constant 0 : index
    %c0_18 = arith.constant 0 : index
    %53 = vector.load %arg6[%c0_17, %c0_18] : memref<8x128xf32, #tpu.memory_space<vmem>>, vector<8x128xf32>
    tpu.vector_store %arg6[%c0_17, %c0_18], %52 {strides = array<i32>} : memref<8x128xf32, #tpu.memory_space<vmem>>, vector<8x128xf32>,
    return
  }
  func.func @transform_0(%arg0: i32) -> (i32, i32, i32) {
    %c0_i32 = arith.constant 0 : i32
    %c0_i32_0 = arith.constant 0 : i32
    %c0_i32_1 = arith.constant 0 : i32
    return %arg0, %c0_i32, %c0_i32_0 : i32, i32, i32
  }
  func.func @transform_1(%arg0: i32) -> (i32, i32) {
    %c0_i32 = arith.constant 0 : i32
    %c0_i32_0 = arith.constant 0 : i32
    %c0_i32_1 = arith.constant 0 : i32
    return %c0_i32, %c0_i32_0 : i32, i32
  }
  func.func @transform_2(%arg0: i32) -> (i32, i32) {
    %c0_i32 = arith.constant 0 : i32
    %c0_i32_0 = arith.constant 0 : i32
    %c0_i32_1 = arith.constant 0 : i32
    return %c0_i32, %c0_i32_0 : i32, i32
  }
  func.func @transform_3(%arg0: i32) -> (i32, i32) {
    %c0_i32 = arith.constant 0 : i32
    %c0_i32_0 = arith.constant 0 : i32
    %c0_i32_1 = arith.constant 0 : i32
    return %c0_i32, %c0_i32_0 : i32, i32
  }
  func.func @transform_4(%arg0: i32) -> (i32, i32) {
    %c0_i32 = arith.constant 0 : i32
    %c0_i32_0 = arith.constant 0 : i32
    return %c0_i32, %arg0 : i32, i32
  }
  func.func @transform_5(%arg0: i32) -> (i32, i32) {
    %c0_i32 = arith.constant 0 : i32
    %c0_i32_0 = arith.constant 0 : i32
    return %c0_i32, %arg0 : i32, i32
  }
}

</mosaic_0001>

<llo_original>
// kernel: tpu_custom_call.1
$region0: #{tpu_custom_call.1}
  #allocation0 [shape = 'u32[]', space=smem, size = 0x4, offset = 0x4, fixed_abs, tag = 'smem constant byte address 0x4 - core index']
  #allocation1 [shape = 'u32[144,128]{1,0:T(1,128)}', space=vmem, size = 0x12000, scoped, tag = 'internal scratch']
  %s0 = inlined_call_operand.vmem [shape: f32[1,24,132], index: 0, kind: input, shape index: {}]
  %s1 = inlined_call_operand.vmem [shape: f32[32,24], index: 1, kind: input, shape index: {}]
  %s2 = inlined_call_operand.vmem [shape: f32[32,16], index: 2, kind: input, shape index: {}]
  %s3 = inlined_call_operand.vmem [shape: f32[16,1], index: 3, kind: input, shape index: {}]
  %s4 = inlined_call_operand.hbm [shape: f32[8,128], index: 4, kind: output, shape index: {0}]
  %s5 = inlined_call_operand.hbm [shape: f32[8,128], index: 5, kind: output, shape index: {1}]
  %6 = xla_tuple %s4, %s5
  %s7 = sld [smem:[#allocation0]]
  $region34: #{tpu_custom_call.1} parent=0
    _
  %s9 = ssub.s32 1, %s7
  %s10 = scalar_select 0, %s9, %s7
  $region1: #{tpu_custom_call.1} parent=0
    #allocation2 [shape = 'u8[4096]{0}', space=vmem, size = 0x1000, scoped, tag = 'output window, operand 0, single buffered']
    #allocation3 [shape = 's32[1]{0}', space=sflag, size = 0x4, scoped, tag = 'scoped memory for tpu_custom_call.1']
    #allocation4 [shape = 'u8[4096]{0}', space=vmem, size = 0x1000, scoped, tag = 'output window, operand 1, single buffered']
    #allocation5 [shape = 's32[1]{0}', space=sflag, size = 0x4, scoped, tag = 'scoped memory for tpu_custom_call.1']
    %11 = vsyncpa [#allocation3], 0
    %12 = vsyncpa [#allocation5], 0
    // Predicated region
    $region2: #{tpu_custom_call.1} parent=1 // pred_check
      _
    $region3: #{tpu_custom_call.1} parent=1 // pred_check_branch
      %14 = sbr.rel (0) target = $region5
    $region4: #{tpu_custom_call.1} parent=1 // pred_region
      _
    $region5: #{tpu_custom_call.1} parent=1 // pred_fallthru
      _
    // Predicated region
    $region6: #{tpu_custom_call.1} parent=1 // pred_check
      _
    $region7: #{tpu_custom_call.1} parent=1 // pred_check_branch
      %16 = sbr.rel (0) target = $region9
    $region8: #{tpu_custom_call.1} parent=1 // pred_region
      _
    $region9: #{tpu_custom_call.1} parent=1 // pred_fallthru
      _
    // Predicated region
    $region10: #{tpu_custom_call.1} parent=1 // pred_check
      _
    $region11: #{tpu_custom_call.1} parent=1 // pred_check_branch
      %18 = sbr.rel (0) target = $region13
    $region12: #{tpu_custom_call.1} parent=1 // pred_region
      _
    $region13: #{tpu_custom_call.1} parent=1 // pred_fallthru
      _
    // Predicated region
    $region14: #{tpu_custom_call.1} parent=1 // pred_check
      _
    $region15: #{tpu_custom_call.1} parent=1 // pred_check_branch
      %20 = sbr.rel (0) target = $region17
    $region16: #{tpu_custom_call.1} parent=1 // pred_region
      _
    $region17: #{tpu_custom_call.1} parent=1 // pred_fallthru
      _
    %v21 = vld [vmem:[%s0] sm:$0xff]
    %v22 = vld [vmem:[%s0 + $0x8] sm:$0xff]
    %v23 = vld [vmem:[%s0 + $0x10] sm:$0xff]
    %v24 = vld [vmem:[%s0 + $0x18] sm:$0xff]
    %v25 = vld [vmem:[%s0 + $0x20] sm:$0xff]
    %v26 = vld [vmem:[%s0 + $0x28] sm:$0xff]
    %v27 = vld [vmem:[%s1] sm:$0xff]
    %v28 = vld [vmem:[%s1 + $0x8] sm:$0xff]
    %v29 = vld [vmem:[%s1 + $0x10] sm:$0xff]
    %v30 = vld [vmem:[%s1 + $0x18] sm:$0xff]
    %vm31 = vcmask 195584
    %v33 = vsel %vm31, %v27, 0
    %v36 = vsel %vm31, %v28, 0
    %v39 = vsel %vm31, %v29, 0
    %v42 = vsel %vm31, %v30, 0
    %44 = vmatprep.subr.mxu0 %v22
    %45 = vmatpush1.msra.mxu0 %v21
    %46 = vmatprep.subr.mxu0 %v24
    %47 = vmatpush1.msra.mxu0 %v23
    %48 = vmatprep.subr.mxu0 %v26
    %49 = vmatpush1.msra.mxu0 %v25
    %50 = vmatprep.subr.mxu0 0.0
    %51 = vmatpush1.msra.mxu0 0.0
    %52 = vmatprep.subr.mxu0 0.0
    %53 = vmatpush1.msra.mxu0 0.0
    %54 = vmatprep.subr.mxu0 0.0
    %55 = vmatpush1.msra.mxu0 0.0
    %56 = vmatprep.subr.mxu0 0.0
    %57 = vmatpush1.msra.mxu0 0.0
    %58 = vmatprep.subr.mxu0 0.0
    %59 = vmatpush1.msra.mxu0 0.0
    %60 = vmatprep.subr.mxu0 0.0
    %61 = vmatpush1.msra.mxu0 0.0
    %62 = vmatprep.subr.mxu0 0.0
    %63 = vmatpush1.msra.mxu0 0.0
    %64 = vmatprep.subr.mxu0 0.0
    %65 = vmatpush1.msra.mxu0 0.0
    %66 = vmatprep.subr.mxu0 0.0
    %67 = vmatpush1.msra.mxu0 0.0
    %68 = vmatprep.subr.mxu0 0.0
    %69 = vmatpush1.msra.mxu0 0.0
    %70 = vmatprep.subr.mxu0 0.0
    %71 = vmatpush1.msra.mxu0 0.0
    %72 = vmatprep.subr.mxu0 0.0
    %73 = vmatpush1.msra.mxu0 0.0
    %74 = vmatprep.subr.mxu0 0.0
    %75 = vmatpush1.msra.mxu0 0.0
    %76 = vmatprep.subr.mxu0 0.0
    %77 = vmatpush1.msra.mxu0 0.0
    %78 = vmatprep.subr.mxu0 0.0
    %79 = vmatpush1.msra.mxu0 0.0
    %80 = vmatprep.subr.mxu0 0.0
    %81 = vmatpush1.msra.mxu0 0.0
    %82 = vmatprep.subr.mxu0 0.0
    %83 = vmatpush1.msra.mxu0 0.0
    %84 = vmatprep.subr.mxu0 0.0
    %85 = vmatpush1.msra.mxu0 0.0
    %86 = vmatprep.subr.mxu0 0.0
    %87 = vmatpush1.msra.mxu0 0.0
    %88 = vmatprep.subr.mxu0 0.0
    %89 = vmatpush1.msra.mxu0 0.0
    %90 = vmatprep.subr.mxu0 0.0
    %91 = vmatpush1.msra.mxu0 0.0
    %92 = vmatprep.subr.mxu0 0.0
    %93 = vmatpush1.msra.mxu0 0.0
    %94 = vmatprep.subr.mxu0 0.0
    %95 = vmatpush1.msra.mxu0 0.0
    %96 = vmatprep.subr.mxu0 0.0
    %97 = vmatpush1.msra.mxu0 0.0
    %98 = vmatprep.subr.mxu0 0.0
    %99 = vmatpush1.msra.mxu0 0.0
    %100 = vmatprep.subr.mxu0 0.0
    %101 = vmatpush1.msra.mxu0 0.0
    %102 = vmatprep.subr.mxu0 0.0
    %103 = vmatpush1.msra.mxu0 0.0
    %104 = vmatprep.subr.mxu0 0.0
    %105 = vmatpush1.msra.mxu0 0.0
    %106 = vmatprep.subr.mxu0 0.0
    %107 = vmatpush1.msra.mxu0 0.0
    %108 = vmatprep.mubr.f32.mxu0 0.0
    %109 = vmatmul.mubr.f32.gmra.mrb[0].mxu0 %v33
    %v110 = vpop.f32.mrb[0].mxu0
    %v111 = vadd.f32 0.0, %v110
    %v112 = vpop.f32.mrb[0].mxu0
    %v113 = vadd.f32 0.0, %v112
    %114 = vmatprep.mubr.f32.mxu0 0.0
    %115 = vmatmul.mubr.f32.gmra.mrb[0].mxu0 %v36
    %v116 = vpop.f32.mrb[0].mxu0
    %v117 = vadd.f32 0.0, %v116
    %v118 = vpop.f32.mrb[0].mxu0
    %v119 = vadd.f32 0.0, %v118
    %120 = vmatprep.mubr.f32.mxu0 0.0
    %121 = vmatmul.mubr.f32.gmra.mrb[0].mxu0 %v39
    %v122 = vpop.f32.mrb[0].mxu0
    %v123 = vadd.f32 0.0, %v122
    %v124 = vpop.f32.mrb[0].mxu0
    %v125 = vadd.f32 0.0, %v124
    %126 = vmatprep.mubr.f32.mxu0 0.0
    %127 = vmatmul.mubr.f32.gmra.mrb[0].mxu0 %v42
    %v128 = vpop.f32.mrb[0].mxu0
    %v129 = vadd.f32 0.0, %v128
    %v130 = vpop.f32.mrb[0].mxu0
    %v131 = vadd.f32 0.0, %v130
    %132 = vdwg.mxu0
    %135 = vrot.lane.b32.xlu0 %v117, 127
    %v136 = vpop.permute.xlu0 %135
    %137 = vrot.lane.b32.xlu0 %v119, 127
    %v138 = vpop.permute.xlu0 %137
    %vm139 = vcmask 1039360
    %v140 = vsel %vm139, %v136, %v138
    %v143 = vadd.f32 %v111, %v140
    %v144 = vadd.f32 %v113, %v138
    %v145 = vmax.f32 %v143, 0.0
    %v146 = vmax.f32 %v144, 0.0
    %149 = vrot.lane.b32.xlu0 %v129, 127
    %v150 = vpop.permute.xlu0 %149
    %151 = vrot.lane.b32.xlu0 %v131, 127
    %v152 = vpop.permute.xlu0 %151
    %v153 = vsel %vm139, %v150, %v152
    %v156 = vadd.f32 %v123, %v153
    %v157 = vadd.f32 %v125, %v152
    %v158 = vmax.f32 %v156, 0.0
    %v159 = vmax.f32 %v157, 0.0
    %s160 = smul.u32 0, 128
    %s161 = ssub.s32 %s160, 1
    %v162 = vlaneseq
    %v163 = vand.u32 %v162, 127
    %v164 = vadd.s32 %v163, 128
    %v165 = vstv %s161
    %v166 = vadd.s32 %v165, %v163
    %v167 = vadd.s32 %v165, %v164
    %vm168 = vcmp.ge.s32.totalorder %v166, 0
    %vm169 = vcmp.ge.s32.totalorder %v167, 0
    %vm170 = vcmp.lt.s32.totalorder %v166, 8
    %vm171 = vcmp.lt.s32.totalorder %v167, 8
    %vm172 = vmand %vm168, %vm170
    %vm173 = vmand %vm169, %vm171
    %v174 = vsel %vm172, 1, 0
    %v175 = vsel %vm173, 1, 0
    %vm176 = vcmp.eq.s32.totalorder %v174, 1
    %vm177 = vcmp.eq.s32.totalorder %v175, 1
    %v178 = vsel %vm176, %v145, 0.0
    %v179 = vsel %vm177, %v146, 0.0
    %182 = vrot.lane.b32.xlu0 %v158, 127
    %v183 = vpop.permute.xlu0 %182
    %184 = vrot.lane.b32.xlu0 %v159, 127
    %v185 = vpop.permute.xlu0 %184
    %v186 = vsel %vm139, %v183, %v185
    %v189 = vsel %vm176, %v186, 0.0
    %v190 = vsel %vm177, %v185, 0.0
    %v191 = vld [vmem:[%s2] sm:$0xff]
    %v192 = vld [vmem:[%s2 + $0x8] sm:$0xff]
    %v193 = vld [vmem:[%s2 + $0x10] sm:$0xff]
    %v194 = vld [vmem:[%s2 + $0x18] sm:$0xff]
    %vm195 = vcmask 130048
    %v197 = vsel %vm195, %v191, 0
    %v200 = vsel %vm195, %v192, 0
    %v203 = vsel %vm195, %v193, 0
    %v206 = vsel %vm195, %v194, 0
    %208 = vmatprep.subr.mxu0 %v179
    %209 = vmatpush1.msra.mxu0 %v178
    %210 = vmatprep.subr.mxu0 %v190
    %211 = vmatpush1.msra.mxu0 %v189
    %212 = vmatprep.subr.mxu0 0.0
    %213 = vmatpush1.msra.mxu0 0.0
    %214 = vmatprep.subr.mxu0 0.0
    %215 = vmatpush1.msra.mxu0 0.0
    %216 = vmatprep.subr.mxu0 0.0
    %217 = vmatpush1.msra.mxu0 0.0
    %218 = vmatprep.subr.mxu0 0.0
    %219 = vmatpush1.msra.mxu0 0.0
    %220 = vmatprep.subr.mxu0 0.0
    %221 = vmatpush1.msra.mxu0 0.0
    %222 = vmatprep.subr.mxu0 0.0
    %223 = vmatpush1.msra.mxu0 0.0
    %224 = vmatprep.subr.mxu0 0.0
    %225 = vmatpush1.msra.mxu0 0.0
    %226 = vmatprep.subr.mxu0 0.0
    %227 = vmatpush1.msra.mxu0 0.0
    %228 = vmatprep.subr.mxu0 0.0
    %229 = vmatpush1.msra.mxu0 0.0
    %230 = vmatprep.subr.mxu0 0.0
    %231 = vmatpush1.msra.mxu0 0.0
    %232 = vmatprep.subr.mxu0 0.0
    %233 = vmatpush1.msra.mxu0 0.0
    %234 = vmatprep.subr.mxu0 0.0
    %235 = vmatpush1.msra.mxu0 0.0
    %236 = vmatprep.subr.mxu0 0.0
    %237 = vmatpush1.msra.mxu0 0.0
    %238 = vmatprep.subr.mxu0 0.0
    %239 = vmatpush1.msra.mxu0 0.0
    %240 = vmatprep.subr.mxu0 0.0
    %241 = vmatpush1.msra.mxu0 0.0
    %242 = vmatprep.subr.mxu0 0.0
    %243 = vmatpush1.msra.mxu0 0.0
    %244 = vmatprep.subr.mxu0 0.0
    %245 = vmatpush1.msra.mxu0 0.0
    %246 = vmatprep.subr.mxu0 0.0
    %247 = vmatpush1.msra.mxu0 0.0
    %248 = vmatprep.subr.mxu0 0.0
    %249 = vmatpush1.msra.mxu0 0.0
    %250 = vmatprep.subr.mxu0 0.0
    %251 = vmatpush1.msra.mxu0 0.0
    %252 = vmatprep.subr.mxu0 0.0
    %253 = vmatpush1.msra.mxu0 0.0
    %254 = vmatprep.subr.mxu0 0.0
    %255 = vmatpush1.msra.mxu0 0.0
    %256 = vmatprep.subr.mxu0 0.0
    %257 = vmatpush1.msra.mxu0 0.0
    %258 = vmatprep.subr.mxu0 0.0
    %259 = vmatpush1.msra.mxu0 0.0
    %260 = vmatprep.subr.mxu0 0.0
    %261 = vmatpush1.msra.mxu0 0.0
    %262 = vmatprep.subr.mxu0 0.0
    %263 = vmatpush1.msra.mxu0 0.0
    %264 = vmatprep.subr.mxu0 0.0
    %265 = vmatpush1.msra.mxu0 0.0
    %266 = vmatprep.subr.mxu0 0.0
    %267 = vmatpush1.msra.mxu0 0.0
    %268 = vmatprep.subr.mxu0 0.0
    %269 = vmatpush1.msra.mxu0 0.0
    %270 = vmatprep.subr.mxu0 0.0
    %271 = vmatpush1.msra.mxu0 0.0
    %272 = vmatprep.mubr.f32.mxu0 0.0
    %273 = vmatmul.mubr.f32.gmra.mrb[0].mxu0 %v197
    %v274 = vpop.f32.mrb[0].mxu0
    %v275 = vadd.f32 0.0, %v274
    %v276 = vpop.f32.mrb[0].mxu0
    %v277 = vadd.f32 0.0, %v276
    %278 = vmatprep.mubr.f32.mxu0 0.0
    %279 = vmatmul.mubr.f32.gmra.mrb[0].mxu0 %v200
    %v280 = vpop.f32.mrb[0].mxu0
    %v281 = vadd.f32 0.0, %v280
    %v282 = vpop.f32.mrb[0].mxu0
    %v283 = vadd.f32 0.0, %v282
    %284 = vmatprep.mubr.f32.mxu0 0.0
    %285 = vmatmul.mubr.f32.gmra.mrb[0].mxu0 %v203
    %v286 = vpop.f32.mrb[0].mxu0
    %v287 = vadd.f32 0.0, %v286
    %v288 = vpop.f32.mrb[0].mxu0
    %289 = vmatprep.mubr.f32.mxu0 0.0
    %290 = vmatmul.mubr.f32.gmra.mrb[0].mxu0 %v206
    %v291 = vpop.f32.mrb[0].mxu0
    %v292 = vadd.f32 0.0, %v291
    %v293 = vpop.f32.mrb[0].mxu0
    %v294 = vadd.f32 0.0, %v293
    %295 = vdwg.mxu0
    %v296 = vld [vmem:[%s3] sm:$0xff]
    %v297 = vld [vmem:[%s3 + $0x8] sm:$0xff]
    %299 = vrot.lane.b32.xlu0 %v287, 1
    %v300 = vpop.permute.xlu0 %299
    %v302 = vadd.f32 %v275, %v300
    %v303 = vadd.f32 %v277, %v300
    %305 = vset.pattern.permute.xlu0 0
    %306 = vperm.xlu0 %305, %v296
    %v307 = vpop.permute.xlu0 %306
    %v309 = vadd.f32 %v302, %v307
    %v310 = vadd.f32 %v303, %v307
    %313 = vrot.lane.b32.xlu0 %v292, 127
    %v314 = vpop.permute.xlu0 %313
    %315 = vrot.lane.b32.xlu0 %v294, 127
    %v316 = vpop.permute.xlu0 %315
    %v317 = vsel %vm139, %v314, %v316
    %v320 = vadd.f32 %v281, %v317
    %v321 = vadd.f32 %v283, %v316
    %323 = vset.pattern.permute.xlu0 0
    %324 = vperm.xlu0 %323, %v297
    %v325 = vpop.permute.xlu0 %324
    %v327 = vadd.f32 %v320, %v325
    %v328 = vadd.f32 %v321, %v325
    %v329 = vmax.f32 %v309, 0.0
    %v330 = vmax.f32 %v310, 0.0
    %333 = vrot.lane.b32.xlu0 %v329, 127
    %v334 = vpop.permute.xlu0 %333
    %335 = vrot.lane.b32.xlu0 %v330, 127
    %v336 = vpop.permute.xlu0 %335
    %v337 = vsel %vm139, %v334, %v336
    %339 = vst [vmem:[#allocation2] sm:$0xff] %v337
    %v340 = vmax.f32 %v327, 0.0
    %v341 = vmax.f32 %v328, 0.0
    %344 = vrot.lane.b32.xlu0 %v340, 127
    %v345 = vpop.permute.xlu0 %344
    %346 = vrot.lane.b32.xlu0 %v341, 127
    %v347 = vpop.permute.xlu0 %346
    %v348 = vsel %vm139, %v345, %v347
    %350 = vst [vmem:[#allocation4] sm:$0xff] %v348
    // Predicated region
    $region18: #{tpu_custom_call.1} parent=1 // pred_check
      _
    $region19: #{tpu_custom_call.1} parent=1 // pred_check_branch
      %352 = sbr.rel (0) target = $region21
    $region20: #{tpu_custom_call.1} parent=1 // pred_region
      %s354 = ssub.s32 128, 128
      %355 = vsyncadd [#allocation3], %s354
      %s357 = sshll.u32 [#allocation2], 4
      %s358 = int_to_ptr.vmem [resolvable:$true] %s357
      %360 = dma.vmem_to_hbm [thread:$0]  %s358, 128, %s4, [#allocation3]
    $region21: #{tpu_custom_call.1} parent=1 // pred_fallthru
      _
    // Predicated region
    $region22: #{tpu_custom_call.1} parent=1 // pred_check
      _
    $region23: #{tpu_custom_call.1} parent=1 // pred_check_branch
      %362 = sbr.rel (0) target = $region25
    $region24: #{tpu_custom_call.1} parent=1 // pred_region
      %s364 = ssub.s32 128, 128
      %365 = vsyncadd [#allocation5], %s364
      %s367 = sshll.u32 [#allocation4], 4
      %s368 = int_to_ptr.vmem [resolvable:$true] %s367
      %370 = dma.vmem_to_hbm [thread:$0]  %s368, 128, %s5, [#allocation5]
    $region25: #{tpu_custom_call.1} parent=1 // pred_fallthru
      _
    // Predicated region
    $region26: #{tpu_custom_call.1} parent=1 // pred_check
      _
    $region27: #{tpu_custom_call.1} parent=1 // pred_check_branch
      %372 = sbr.rel (0) target = $region29
    $region28: #{tpu_custom_call.1} parent=1 // pred_region
      %373 = dma.done [#allocation3], 128
    $region29: #{tpu_custom_call.1} parent=1 // pred_fallthru
      _
    // Predicated region
    $region30: #{tpu_custom_call.1} parent=1 // pred_check
      _
    $region31: #{tpu_custom_call.1} parent=1 // pred_check_branch
      %375 = sbr.rel (0) target = $region33
    $region32: #{tpu_custom_call.1} parent=1 // pred_region
      %376 = dma.done [#allocation5], 128
    $region33: #{tpu_custom_call.1} parent=1 // pred_fallthru
      _
    %377 = vsyncpa [#allocation3], 1
    %378 = vsyncpa [#allocation5], 1

</llo_original>
